<compile_context>
chip_gen: v5e
topology: v5e:2x2
jax: 0.10.0
libtpu: 0.0.40
codegen_flags: <defaults>
</compile_context>

<pallas_src>
import functools

import jax
import jax.numpy as jnp
from jax.experimental import pallas as pl
from jax.experimental.pallas import tpu as pltpu


def _round_up(x, m):
    return ((x + m - 1) // m) * m


def mlp_kernel(x_ref, w1_ref, b1_ref, w2_ref, b2_ref, o_ref):
    # Fused Linear -> ReLU -> Linear; both dots hit the MXU with f32 accumulation.
    x = x_ref[...]                                                # (TB, IN)
    h = jnp.dot(x, w1_ref[...], preferred_element_type=jnp.float32)
    h = jnp.maximum(h + b1_ref[...], 0.0)                         # ReLU, (TB, HID)
    out = jnp.dot(h, w2_ref[...], preferred_element_type=jnp.float32)
    o_ref[...] = (out + b2_ref[...]).astype(o_ref.dtype)          # (TB, OUT)


@functools.partial(jax.jit, static_argnames=("block_b",))
def mlp_forward(x, w1, b1, w2, b2, *, block_b=1024):
    """x: (B, In) f32; w1: (In, Hid); b1: (1, Hid); w2: (Hid, Out); b2: (1, Out).

    Returns (B, Out) f32.  block_b: max batch rows per grid step.  Single-core chips
    (v5e/v6e) like it large (fewer ~0.35us grid steps); for v7x pick block_b <= B/2 on
    large batches so the "parallel" axis shards across both TensorCores.
    """
    B, in_dim = x.shape
    out_dim = w2.shape[1]

    block_b = _round_up(max(block_b, 8), 8)      # guard non-multiple-of-8 callers
    b8 = _round_up(max(B, 8), 8)                 # sublane-aligned batch

    if b8 <= block_b:
        tb = b8                                  # single tile, zero extra padding
    else:
        # Largest tile (multiple of 8, <= block_b) whose pure-padding waste is <= ~6% of
        # the batch; worst case degrades gracefully to tb=8 (always zero waste).
        tb = 8
        for cand in range(block_b, 7, -8):
            if ((-b8) % cand) * 16 <= b8:
                tb = cand
                break
    b_pad = _round_up(b8, tb)

    # Pad only the sublane (batch) dim, and only when actually needed.
    if b_pad != B:
        xp = jnp.zeros((b_pad, in_dim), x.dtype).at[:B, :].set(x)
    else:
        xp = x

    out = pl.pallas_call(
        mlp_kernel,
        out_shape=jax.ShapeDtypeStruct((b_pad, out_dim), jnp.float32),
        grid_spec=pltpu.PrefetchScalarGridSpec(
            num_scalar_prefetch=0,
            grid=(b_pad // tb,),
            in_specs=[
                pl.BlockSpec((tb, in_dim), lambda i: (i, 0)),   # x: tiled over batch only
                pl.BlockSpec(w1.shape, lambda i: (0, 0)),       # weights stay VMEM-resident
                pl.BlockSpec(b1.shape, lambda i: (0, 0)),
                pl.BlockSpec(w2.shape, lambda i: (0, 0)),
                pl.BlockSpec(b2.shape, lambda i: (0, 0)),
            ],
            out_specs=pl.BlockSpec((tb, out_dim), lambda i: (i, 0)),  # narrow (OUT) store
        ),
        compiler_params=pltpu.CompilerParams(
            dimension_semantics=("parallel",)),                 # batch axis shards on v7x
    )(xp, w1, b1, w2, b2)

    if b_pad != B:
        out = out[:B]
    return out


if __name__ == "__main__":
    # Shapes implied by the module: obs (B, input_size), hidden=32, output_size logits.
    B, IN, HID, OUT = 8, 16, 32, 4

    key = jax.random.PRNGKey(0)
    k_x, k_w1, k_b1, k_w2, k_b2, k_big = jax.random.split(key, 6)

    # Deterministic parameter init (PyTorch nn.Linear-style uniform bounds).
    bound1 = 1.0 / jnp.sqrt(jnp.float32(IN))
    bound2 = 1.0 / jnp.sqrt(jnp.float32(HID))
    x = jax.random.normal(k_x, (B, IN), dtype=jnp.float32)
    w1 = jax.random.uniform(k_w1, (IN, HID), minval=-bound1, maxval=bound1, dtype=jnp.float32)
    b1 = jax.random.uniform(k_b1, (1, HID), minval=-bound1, maxval=bound1, dtype=jnp.float32)
    w2 = jax.random.uniform(k_w2, (HID, OUT), minval=-bound2, maxval=bound2, dtype=jnp.float32)
    b2 = jax.random.uniform(k_b2, (1, OUT), minval=-bound2, maxval=bound2, dtype=jnp.float32)

    # Small (module-shaped) call: B=8 is already sublane-aligned -> no wrapper padding pass.
    out = mlp_forward(x, w1, b1, w2, b2)
    jax.block_until_ready(out)
    ref = jnp.maximum(x @ w1 + b1, 0.0) @ w2 + b2
    assert out.shape == (B, OUT)
    assert jnp.allclose(out, ref, atol=1e-5, rtol=1e-5), "mismatch vs reference (small batch)"

    # Batched call with an awkward B (not a multiple of 8) and a small block_b, exercising
    # the sublane-pad path and the multi-step "parallel" grid.
    BB = 300
    xb = jax.random.normal(k_big, (BB, IN), dtype=jnp.float32)
    outb = mlp_forward(xb, w1, b1, w2, b2, block_b=128)
    jax.block_until_ready(outb)
    refb = jnp.maximum(xb @ w1 + b1, 0.0) @ w2 + b2
    assert outb.shape == (BB, OUT)
    assert jnp.allclose(outb, refb, atol=1e-5, rtol=1e-5), "mismatch vs reference (batched)"

    # TODO(synk): Categorical policy sampling (return_policy) is distribution glue, not kernel
    # work; if needed, fuse softmax/sample over the 4 logits into the kernel to shrink the
    # writeback to B x 1.
    print("KERNEL_OK")
</pallas_src>

<mosaic_0001>
module attributes {stable_mosaic.version = 11 : i64} {
  func.func @mlp_kernel(%arg0: i32, %arg1: memref<8x16xf32, #tpu.memory_space<vmem>>, %arg2: memref<16x32xf32, #tpu.memory_space<vmem>>, %arg3: memref<1x32xf32, #tpu.memory_space<vmem>>, %arg4: memref<32x4xf32, #tpu.memory_space<vmem>>, %arg5: memref<1x4xf32, #tpu.memory_space<vmem>>, %arg6: memref<8x4xf32, #tpu.memory_space<vmem>>) attributes {dimension_semantics = [#tpu.dimension_semantics<parallel>], iteration_bounds = array<i64: 1>, scalar_prefetch = 0 : i64, scratch_operands = 0 : i64, tpu.core_type = #tpu.core_type<tc>, window_params = [{transform_indices = @transform_0, window_bounds = array<i64: 8, 16>}, {pipeline_mode = #tpu.pipeline_mode<synchronous>, transform_indices = @transform_1, window_bounds = array<i64: 16, 32>}, {pipeline_mode = #tpu.pipeline_mode<synchronous>, transform_indices = @transform_2, window_bounds = array<i64: 1, 32>}, {pipeline_mode = #tpu.pipeline_mode<synchronous>, transform_indices = @transform_3, window_bounds = array<i64: 32, 4>}, {pipeline_mode = #tpu.pipeline_mode<synchronous>, transform_indices = @transform_4, window_bounds = array<i64: 1, 4>}, {transform_indices = @transform_5, window_bounds = array<i64: 8, 4>}]} {
    %c0 = arith.constant 0 : index
    %c0_0 = arith.constant 0 : index
    %0 = vector.load %arg1[%c0, %c0_0] : memref<8x16xf32, #tpu.memory_space<vmem>>, vector<8x16xf32>
    %c0_1 = arith.constant 0 : index
    %c0_2 = arith.constant 0 : index
    %1 = vector.load %arg2[%c0_1, %c0_2] : memref<16x32xf32, #tpu.memory_space<vmem>>, vector<16x32xf32>
    %cst = arith.constant dense<0.000000e+00> : vector<8x32xf32>
    %2 = tpu.matmul %0, %1, %cst {dimension_numbers = #tpu.dot_dimension_numbers<[1], [0], [0], [1], [0, 0, 1, 1], [], []>} : vector<8x16xf32>, vector<16x32xf32>, vector<8x32xf32> -> vector<8x32xf32>
    %c0_3 = arith.constant 0 : index
    %c0_4 = arith.constant 0 : index
    %3 = vector.load %arg3[%c0_3, %c0_4] : memref<1x32xf32, #tpu.memory_space<vmem>>, vector<1x32xf32>
    %4 = vector.broadcast %3 : vector<1x32xf32> to vector<8x32xf32>
    %5 = arith.addf %2, %4 : vector<8x32xf32>
    %cst_5 = arith.constant 0.000000e+00 : f32
    %6 = vector.broadcast %cst_5 : f32 to vector<8x32xf32>
    %7 = arith.maximumf %5, %6 : vector<8x32xf32>
    %c0_6 = arith.constant 0 : index
    %c0_7 = arith.constant 0 : index
    %8 = vector.load %arg4[%c0_6, %c0_7] : memref<32x4xf32, #tpu.memory_space<vmem>>, vector<32x4xf32>
    %cst_8 = arith.constant dense<0.000000e+00> : vector<8x4xf32>
    %9 = tpu.matmul %7, %8, %cst_8 {dimension_numbers = #tpu.dot_dimension_numbers<[1], [0], [0], [1], [0, 0, 1, 1], [], []>} : vector<8x32xf32>, vector<32x4xf32>, vector<8x4xf32> -> vector<8x4xf32>
    %c0_9 = arith.constant 0 : index
    %c0_10 = arith.constant 0 : index
    %10 = vector.load %arg5[%c0_9, %c0_10] : memref<1x4xf32, #tpu.memory_space<vmem>>, vector<1x4xf32>
    %11 = vector.broadcast %10 : vector<1x4xf32> to vector<8x4xf32>
    %12 = arith.addf %9, %11 : vector<8x4xf32>
    %c0_11 = arith.constant 0 : index
    %c0_12 = arith.constant 0 : index
    %13 = vector.load %arg6[%c0_11, %c0_12] : memref<8x4xf32, #tpu.memory_space<vmem>>, vector<8x4xf32>
    tpu.vector_store %arg6[%c0_11, %c0_12], %12 {strides = array<i32>} : memref<8x4xf32, #tpu.memory_space<vmem>>, vector<8x4xf32>,
    return
  }
  func.func @transform_0(%arg0: i32) -> (i32, i32) {
    %c0_i32 = arith.constant 0 : i32
    %c0_i32_0 = arith.constant 0 : i32
    return %arg0, %c0_i32 : i32, i32
  }
  func.func @transform_1(%arg0: i32) -> (i32, i32) {
    %c0_i32 = arith.constant 0 : i32
    %c0_i32_0 = arith.constant 0 : i32
    %c0_i32_1 = arith.constant 0 : i32
    return %c0_i32, %c0_i32_0 : i32, i32
  }
  func.func @transform_2(%arg0: i32) -> (i32, i32) {
    %c0_i32 = arith.constant 0 : i32
    %c0_i32_0 = arith.constant 0 : i32
    %c0_i32_1 = arith.constant 0 : i32
    return %c0_i32, %c0_i32_0 : i32, i32
  }
  func.func @transform_3(%arg0: i32) -> (i32, i32) {
    %c0_i32 = arith.constant 0 : i32
    %c0_i32_0 = arith.constant 0 : i32
    %c0_i32_1 = arith.constant 0 : i32
    return %c0_i32, %c0_i32_0 : i32, i32
  }
  func.func @transform_4(%arg0: i32) -> (i32, i32) {
    %c0_i32 = arith.constant 0 : i32
    %c0_i32_0 = arith.constant 0 : i32
    %c0_i32_1 = arith.constant 0 : i32
    return %c0_i32, %c0_i32_0 : i32, i32
  }
  func.func @transform_5(%arg0: i32) -> (i32, i32) {
    %c0_i32 = arith.constant 0 : i32
    %c0_i32_0 = arith.constant 0 : i32
    return %arg0, %c0_i32 : i32, i32
  }
}

</mosaic_0001>

<llo_original>
// kernel: mlp_forward.1
$region0: #{mlp_forward.1}
  #allocation0 [shape = 'u32[]', space=smem, size = 0x4, offset = 0x4, fixed_abs, tag = 'smem constant byte address 0x4 - core index']
  #allocation1 [shape = 'u32[72,128]{1,0:T(1,128)}', space=vmem, size = 0x9000, scoped, tag = 'internal scratch']
  %s0 = inlined_call_operand.vmem [shape: f32[8,16], index: 0, kind: input, shape index: {}]
  %s1 = inlined_call_operand.vmem [shape: f32[16,32], index: 1, kind: input, shape index: {}]
  %s2 = inlined_call_operand.vmem [shape: f32[1,32], index: 2, kind: input, shape index: {}]
  %s3 = inlined_call_operand.vmem [shape: f32[32,4], index: 3, kind: input, shape index: {}]
  %s4 = inlined_call_operand.vmem [shape: f32[1,4], index: 4, kind: input, shape index: {}]
  %s5 = inlined_call_operand.vmem [shape: f32[8,4], index: 5, kind: output, shape index: {}]
  %s6 = sld [smem:[#allocation0]]
  $region30: #{mlp_forward.1} parent=0
    _
  %s8 = ssub.s32 1, %s6
  %s9 = scalar_select 0, %s8, %s6
  // Predicated region
  $region2: #{mlp_forward.1} parent=0 // pred_check
    _
  $region3: #{mlp_forward.1} parent=0 // pred_check_branch
    %11 = sbr.rel (0) target = $region5
  $region4: #{mlp_forward.1} parent=0 // pred_region
    _
  $region5: #{mlp_forward.1} parent=0 // pred_fallthru
    _
  // Predicated region
  $region6: #{mlp_forward.1} parent=0 // pred_check
    _
  $region7: #{mlp_forward.1} parent=0 // pred_check_branch
    %13 = sbr.rel (0) target = $region9
  $region8: #{mlp_forward.1} parent=0 // pred_region
    _
  $region9: #{mlp_forward.1} parent=0 // pred_fallthru
    _
  // Predicated region
  $region10: #{mlp_forward.1} parent=0 // pred_check
    _
  $region11: #{mlp_forward.1} parent=0 // pred_check_branch
    %15 = sbr.rel (0) target = $region13
  $region12: #{mlp_forward.1} parent=0 // pred_region
    _
  $region13: #{mlp_forward.1} parent=0 // pred_fallthru
    _
  // Predicated region
  $region14: #{mlp_forward.1} parent=0 // pred_check
    _
  $region15: #{mlp_forward.1} parent=0 // pred_check_branch
    %17 = sbr.rel (0) target = $region17
  $region16: #{mlp_forward.1} parent=0 // pred_region
    _
  $region17: #{mlp_forward.1} parent=0 // pred_fallthru
    _
  // Predicated region
  $region18: #{mlp_forward.1} parent=0 // pred_check
    _
  $region19: #{mlp_forward.1} parent=0 // pred_check_branch
    %19 = sbr.rel (0) target = $region21
  $region20: #{mlp_forward.1} parent=0 // pred_region
    _
  $region21: #{mlp_forward.1} parent=0 // pred_fallthru
    _
  %v20 = vld [vmem:[%s0] sm:$0xff]
  %v21 = vld [vmem:[%s1] sm:$0xff]
  %v22 = vld [vmem:[%s1 + $0x8] sm:$0xff]
  %v23 = vld [vmem:[%s2] sm:$0x1]
  %v25 = vperm.slane %v23, 0
  %vm27 = vcmask 130048
  %v29 = vsel %vm27, %v20, 0
  %31 = vmatpush.msra.mxu0 0.0
  %32 = vmatpush.msra.mxu0 0.0
  %33 = vmatpush.msra.mxu0 0.0
  %34 = vmatpush.msra.mxu0 0.0
  %35 = vmatpush.msra.mxu0 0.0
  %36 = vmatpush.msra.mxu0 0.0
  %37 = vmatpush.msra.mxu0 0.0
  %38 = vmatpush.msra.mxu0 0.0
  %39 = vmatpush.msra.mxu0 0.0
  %40 = vmatpush.msra.mxu0 0.0
  %41 = vmatpush.msra.mxu0 0.0
  %42 = vmatpush.msra.mxu0 0.0
  %43 = vmatpush.msra.mxu0 0.0
  %44 = vmatpush.msra.mxu0 0.0
  %45 = vmatpush.msra.mxu0 %v22
  %46 = vmatpush.msra.mxu0 %v21
  %47 = vmatmul.f32.gmra.mxu0 %v29
  %v48 = vpop.f32.mrf.mxu0
  %v49 = vadd.f32 %v25, %v48
  %50 = vdwg.mxu0
  %v51 = vmax.f32 %v49, 0.0
  %v52 = vld [vmem:[%s3] sm:$0xff]
  %v53 = vld [vmem:[%s3 + $0x8] sm:$0xff]
  %v54 = vld [vmem:[%s3 + $0x10] sm:$0xff]
  %v55 = vld [vmem:[%s3 + $0x18] sm:$0xff]
  %v56 = vld [vmem:[%s4] sm:$0x1]
  %v58 = vperm.slane %v56, 0
  %vm60 = vcmask 261120
  %v62 = vsel %vm60, %v51, 0
  %64 = vmatpush.msra.mxu0 0.0
  %65 = vmatpush.msra.mxu0 0.0
  %66 = vmatpush.msra.mxu0 0.0
  %67 = vmatpush.msra.mxu0 0.0
  %68 = vmatpush.msra.mxu0 0.0
  %69 = vmatpush.msra.mxu0 0.0
  %70 = vmatpush.msra.mxu0 0.0
  %71 = vmatpush.msra.mxu0 0.0
  %72 = vmatpush.msra.mxu0 0.0
  %73 = vmatpush.msra.mxu0 0.0
  %74 = vmatpush.msra.mxu0 0.0
  %75 = vmatpush.msra.mxu0 0.0
  %76 = vmatpush.msra.mxu0 %v55
  %77 = vmatpush.msra.mxu0 %v54
  %78 = vmatpush.msra.mxu0 %v53
  %79 = vmatpush.msra.mxu0 %v52
  %80 = vmatmul.f32.gmra.mxu0 %v62
  %v81 = vpop.f32.mrf.mxu0
  %v82 = vadd.f32 %v58, %v81
  %83 = vdwg.mxu0
  %vm84 = vcmask 31744
  %85 = vst.msk [vmem:[%s5] sm:$0xff] %vm84, %v82
  // Predicated region
  $region22: #{mlp_forward.1} parent=0 // pred_check
    _
  $region23: #{mlp_forward.1} parent=0 // pred_check_branch
    %87 = sbr.rel (0) target = $region25
  $region24: #{mlp_forward.1} parent=0 // pred_region
    _
  $region25: #{mlp_forward.1} parent=0 // pred_fallthru
    _
  // Predicated region
  $region26: #{mlp_forward.1} parent=0 // pred_check
    _
  $region27: #{mlp_forward.1} parent=0 // pred_check_branch
    %89 = sbr.rel (0) target = $region29
  $region28: #{mlp_forward.1} parent=0 // pred_region
    _
  $region29: #{mlp_forward.1} parent=0 // pred_fallthru
    _

</llo_original>
